<compile_context>
chip_gen: v7x
topology: tpu7x:2x2x1
jax: 0.10.0
libtpu: 0.0.40
codegen_flags: <defaults>
</compile_context>

<pallas_src>
import functools
import math

import jax
import jax.numpy as jnp
from jax.experimental import pallas as pl
from jax.experimental.pallas import tpu as pltpu


_NEG_INF = -1e30  # finite "minus infinity": exp(x - m) underflows cleanly to 0


def _pick_tile(dim, cap, multiple):
    """Largest divisor of `dim` that is <= cap and a multiple of `multiple`.

    Falls back to the full dimension (always legal for a BlockSpec).  Use
    multiple=128 for lane (last) block dims and multiple=8 for sublane dims.
    """
    if dim <= cap:
        return dim
    t = (cap // multiple) * multiple
    while t >= multiple:
        if dim % t == 0:
            return t
        t -= multiple
    return dim


# ----------------------------------------------------------------------------
# Kernel 1: tiled linear layer  y = x @ W + b   (used for the QKV projection)
# ----------------------------------------------------------------------------
def _linear_kernel(x_ref, w_ref, b_ref, o_ref, acc_ref):
    k = pl.program_id(2)

    @pl.when(k == 0)
    def _init():
        acc_ref[...] = jnp.zeros_like(acc_ref)

    acc_ref[...] += jnp.dot(x_ref[...], w_ref[...],
                            preferred_element_type=jnp.float32)

    @pl.when(k == pl.num_programs(2) - 1)
    def _finalize():
        o_ref[...] = (acc_ref[...] + b_ref[...].astype(jnp.float32)
                      ).astype(o_ref.dtype)


def pallas_linear(x, w, b, *, tm_cap=256, tn_cap=512, tk_cap=512):
    """x: (M, K), w: (K, N), b: (N,) -> (M, N)  (tiled, K-accumulating)."""
    M, K = x.shape
    Kw, N = w.shape
    assert K == Kw and b.shape == (N,)

    tm = _pick_tile(M, tm_cap, 8)
    tn = _pick_tile(N, tn_cap, 128)
    tk = _pick_tile(K, tk_cap, 128)
    grid = (M // tm, N // tn, K // tk)

    return pl.pallas_call(
        _linear_kernel,
        out_shape=jax.ShapeDtypeStruct((M, N), x.dtype),
        grid=grid,
        in_specs=[
            pl.BlockSpec((tm, tk), lambda i, j, k: (i, k)),
            pl.BlockSpec((tk, tn), lambda i, j, k: (k, j)),
            pl.BlockSpec((1, tn), lambda i, j, k: (0, j)),
        ],
        out_specs=pl.BlockSpec((tm, tn), lambda i, j, k: (i, j)),
        scratch_shapes=[pltpu.VMEM((tm, tn), jnp.float32)],
        compiler_params=pltpu.CompilerParams(
            dimension_semantics=("parallel", "parallel", "arbitrary")),
    )(x, w, b.reshape(1, N))


# ----------------------------------------------------------------------------
# Kernel 2: flash attention, grid (B, H, nQ); K/V VMEM-resident per (b, h)
# ----------------------------------------------------------------------------
def _flash_attn_kernel(q_ref, k_ref, v_ref, o_ref, *, tq, tkv, scale):
    qi = pl.program_id(2)
    hd = q_ref.shape[-1]

    # Fold the softmax scale into q once per (tq, hd) block, not per KV step.
    q = q_ref[...] * scale

    def attend(c, carry, *, masked):
        m_prev, l_prev, acc_prev = carry
        start = pl.multiple_of(c * tkv, tkv)
        k = k_ref[pl.ds(start, tkv), :]            # (tkv, hd) from resident K
        v = v_ref[pl.ds(start, tkv), :]            # (tkv, hd) from resident V

        # QK^T without an in-kernel transpose: contract the last dims
        # (trans_b form, native on the MXU).
        s = jax.lax.dot_general(
            q, k, (((1,), (1,)), ((), ())),
            preferred_element_type=jnp.float32)    # (tq, tkv) f32

        if masked:
            # Only diagonal chunks build/apply the causal mask.
            row = qi * tq + jax.lax.broadcasted_iota(jnp.int32, (tq, tkv), 0)
            col = start + jax.lax.broadcasted_iota(jnp.int32, (tq, tkv), 1)
            s = jnp.where(row >= col, s, _NEG_INF)

        m_cur = jnp.max(s, axis=-1, keepdims=True)
        m_new = jnp.maximum(m_prev, m_cur)
        alpha = jnp.exp(m_prev - m_new)
        p = jnp.exp(s - m_new)
        l_new = alpha * l_prev + jnp.sum(p, axis=-1, keepdims=True)
        acc_new = alpha * acc_prev + jnp.dot(
            p.astype(v_ref.dtype), v, preferred_element_type=jnp.float32)
        return m_new, l_new, acc_new

    carry = (jnp.full((tq, 1), _NEG_INF, dtype=jnp.float32),   # running max
             jnp.zeros((tq, 1), dtype=jnp.float32),            # running denom
             jnp.zeros((tq, hd), dtype=jnp.float32))           # accumulator

    # Chunks fully below the diagonal take the unmasked fast path; the
    # trailing chunk(s) intersecting the diagonal take the masked path.
    # Chunks entirely above the diagonal are never visited (and were never
    # streamed from HBM: K/V already live in VMEM for this (b, h)).
    n_full = (qi * tq) // tkv
    n_stop = ((qi + 1) * tq + tkv - 1) // tkv

    carry = jax.lax.fori_loop(
        0, n_full, lambda c, cr: attend(c, cr, masked=False), carry)
    carry = jax.lax.fori_loop(
        n_full, n_stop, lambda c, cr: attend(c, cr, masked=True), carry)

    _, l_fin, acc_fin = carry
    # Exact normalization: runs once per output tile, so approx-recip buys nothing.
    o_ref[...] = (acc_fin / l_fin).astype(o_ref.dtype)


def pallas_flash_attention(qkv3, n_head, *, tq_cap=256, tkv_cap=512):
    """qkv3: (B, 3H, T, hd) with [q heads | k heads | v heads] along axis 1.
    Returns the attention output (B, H, T, hd)."""
    B, three_h, T, hd = qkv3.shape
    H = n_head
    assert three_h == 3 * H

    tq = _pick_tile(T, tq_cap, 8)
    tkv = _pick_tile(T, tkv_cap, 128)
    scale = 1.0 / math.sqrt(hd)
    grid = (B, H, T // tq)

    q_spec = pl.BlockSpec((None, None, tq, hd), lambda b, h, qi: (b, h, qi, 0))
    # Full-T K/V blocks whose index is independent of qi: fetched once per
    # (b, h), kept VMEM-resident across all query tiles (repeated copies are
    # elided).  VMEM cost is 2 tensors x 2 buffers x T*hd*dtype; for very long
    # T (>>8K) cap residency (chunk T) — trivial at GPT-2's T=1024.
    k_spec = pl.BlockSpec((None, None, T, hd), lambda b, h, qi: (b, H + h, 0, 0))
    v_spec = pl.BlockSpec((None, None, T, hd), lambda b, h, qi: (b, 2 * H + h, 0, 0))
    o_spec = pl.BlockSpec((None, None, tq, hd), lambda b, h, qi: (b, h, qi, 0))

    kernel = functools.partial(_flash_attn_kernel, tq=tq, tkv=tkv, scale=scale)

    return pl.pallas_call(
        kernel,
        out_shape=jax.ShapeDtypeStruct((B, H, T, hd), qkv3.dtype),
        grid=grid,
        in_specs=[q_spec, k_spec, v_spec],
        out_specs=o_spec,
        compiler_params=pltpu.CompilerParams(
            dimension_semantics=("parallel", "parallel", "parallel")),
    )(qkv3, qkv3, qkv3)


# ----------------------------------------------------------------------------
# Kernel 3: output projection with the head-merge transpose fused in.
#   out[b, t, n] = sum_h  y[b, h, t, :] @ W[h, :, n]  + bias[n]
# ----------------------------------------------------------------------------
def _proj_kernel(y_ref, w_ref, b_ref, o_ref, acc_ref):
    h = pl.program_id(3)

    @pl.when(h == 0)
    def _init():
        acc_ref[...] = jnp.zeros_like(acc_ref)

    acc_ref[...] += jnp.dot(y_ref[...], w_ref[...],
                            preferred_element_type=jnp.float32)

    @pl.when(h == pl.num_programs(3) - 1)
    def _finalize():
        o_ref[...] = (acc_ref[...] + b_ref[...].astype(jnp.float32)
                      ).astype(o_ref.dtype)


def pallas_proj_from_heads(y, w, b, *, tm_cap=256, tn_cap=512):
    """y: (B, H, T, hd), w: (H*hd, N), b: (N,) -> (B, T, N).

    Reads the attention output in its native head-major layout (no XLA
    transpose / head merge); the head axis is the reduction grid axis.
    """
    B, H, T, hd = y.shape
    K, N = w.shape
    assert K == H * hd and b.shape == (N,)
    w3 = w.reshape(H, hd, N)  # pure reshape, no data movement

    tm = _pick_tile(T, tm_cap, 8)
    tn = _pick_tile(N, tn_cap, 128)
    grid = (B, T // tm, N // tn, H)

    return pl.pallas_call(
        _proj_kernel,
        out_shape=jax.ShapeDtypeStruct((B, T, N), y.dtype),
        grid=grid,
        in_specs=[
            pl.BlockSpec((None, None, tm, hd), lambda bi, i, j, h: (bi, h, i, 0)),
            pl.BlockSpec((None, hd, tn), lambda bi, i, j, h: (h, 0, j)),
            pl.BlockSpec((1, tn), lambda bi, i, j, h: (0, j)),
        ],
        out_specs=pl.BlockSpec((None, tm, tn), lambda bi, i, j, h: (bi, i, j)),
        scratch_shapes=[pltpu.VMEM((tm, tn), jnp.float32)],
        compiler_params=pltpu.CompilerParams(
            dimension_semantics=("parallel", "parallel", "parallel",
                                 "arbitrary")),
    )(y, w3, b.reshape(1, N))


# ----------------------------------------------------------------------------
# Module: CausalSelfAttention forward
# ----------------------------------------------------------------------------
def init_params(key, n_embd):
    """nn.Linear-style init (uniform +/- 1/sqrt(fan_in)); weights stored as
    (in_features, out_features)."""
    k1, k2, k3, k4 = jax.random.split(key, 4)
    bound = 1.0 / math.sqrt(n_embd)
    w_attn = jax.random.uniform(k1, (n_embd, 3 * n_embd), jnp.float32, -bound, bound)
    b_attn = jax.random.uniform(k2, (3 * n_embd,), jnp.float32, -bound, bound)
    w_proj = jax.random.uniform(k3, (n_embd, n_embd), jnp.float32, -bound, bound)
    b_proj = jax.random.uniform(k4, (n_embd,), jnp.float32, -bound, bound)
    return w_attn, b_attn, w_proj, b_proj


def causal_self_attention(x, params, n_head):
    """x: (B, T, C) -> (B, T, C); matches the PyTorch module's forward."""
    w_attn, b_attn, w_proj, b_proj = params
    Bb, T, C = x.shape
    H = n_head
    hd = C // H

    # QKV projection (tiled Pallas matmul).
    qkv = pallas_linear(x.reshape(Bb * T, C), w_attn, b_attn)        # (B*T, 3C)

    # TODO(synk): the remaining (B,T,3C)->(B,3H,T,hd) head split is a single
    # XLA relayout; fusing it into the matmul out_spec needs either per-head
    # N-tiles (grid-overhead blow-up) or an in-kernel accumulator relayout.
    qkv = qkv.reshape(Bb, T, 3 * H, hd).transpose(0, 2, 1, 3)        # (B, 3H, T, hd)

    y = pallas_flash_attention(qkv, n_head)                          # (B, H, T, hd)

    # Output projection with the head-merge transpose fused into the kernel.
    return pallas_proj_from_heads(y, w_proj, b_proj)                 # (B, T, C)


# ----------------------------------------------------------------------------
# Pure-JAX reference for validation (full-precision matmuls)
# ----------------------------------------------------------------------------
def reference(x, params, n_head):
    w_attn, b_attn, w_proj, b_proj = params
    Bb, T, C = x.shape
    hd = C // n_head
    hp = jax.lax.Precision.HIGHEST
    qkv = jnp.dot(x, w_attn, precision=hp) + b_attn
    q, k, v = jnp.split(qkv, 3, axis=2)
    q = q.reshape(Bb, T, n_head, hd).transpose(0, 2, 1, 3)
    k = k.reshape(Bb, T, n_head, hd).transpose(0, 2, 1, 3)
    v = v.reshape(Bb, T, n_head, hd).transpose(0, 2, 1, 3)
    s = jnp.einsum("bhqd,bhkd->bhqk", q, k, precision=hp) / math.sqrt(hd)
    mask = jnp.tril(jnp.ones((T, T), dtype=bool))
    s = jnp.where(mask[None, None], s, -jnp.inf)
    p = jax.nn.softmax(s, axis=-1)
    y = jnp.einsum("bhqk,bhkd->bhqd", p, v, precision=hp)
    y = y.transpose(0, 2, 1, 3).reshape(Bb, T, C)
    return jnp.dot(y, w_proj, precision=hp) + b_proj


if __name__ == "__main__":
    # Small, module-consistent shapes: batch=2, seq=8, n_embd=32, n_head=4.
    Bb, T, C, n_head = 2, 8, 32, 4
    key = jax.random.PRNGKey(0)
    kx, kp = jax.random.split(key)
    x = jax.random.normal(kx, (Bb, T, C), jnp.float32)
    params = init_params(kp, C)

    y = causal_self_attention(x, params, n_head)
    y = jax.block_until_ready(y)

    y_ref = reference(x, params, n_head)
    assert y.shape == (Bb, T, C)
    # Exact softmax normalization restored; the remaining budget only covers
    # MXU multi-pass f32 rounding vs the XLA HIGHEST-precision reference.
    assert jnp.allclose(y, y_ref, atol=2e-4, rtol=2e-4), "mismatch vs reference"

    print("KERNEL_OK")
</pallas_src>

<mosaic_0001>
module attributes {stable_mosaic.version = 11 : i64} {
  func.func @_linear_kernel(%arg0: i32, %arg1: i32, %arg2: i32, %arg3: memref<16x32xf32, #tpu.memory_space<vmem>>, %arg4: memref<32x96xf32, #tpu.memory_space<vmem>>, %arg5: memref<1x96xf32, #tpu.memory_space<vmem>>, %arg6: memref<16x96xf32, #tpu.memory_space<vmem>>, %arg7: memref<16x96xf32, #tpu.memory_space<vmem>>) attributes {dimension_semantics = [#tpu.dimension_semantics<parallel>, #tpu.dimension_semantics<parallel>, #tpu.dimension_semantics<arbitrary>], iteration_bounds = array<i64: 1, 1, 1>, scalar_prefetch = 0 : i64, scratch_operands = 1 : i64, tpu.core_type = #tpu.core_type<tc>, window_params = [{transform_indices = @transform_0, window_bounds = array<i64: 16, 32>}, {transform_indices = @transform_1, window_bounds = array<i64: 32, 96>}, {transform_indices = @transform_2, window_bounds = array<i64: 1, 96>}, {transform_indices = @transform_3, window_bounds = array<i64: 16, 96>}]} {
    %c0_i32 = arith.constant 0 : i32
    %0 = arith.cmpi eq, %arg2, %c0_i32 : i32
    %1 = arith.extui %0 : i1 to i32
    %c0_i32_0 = arith.constant 0 : i32
    %2 = arith.cmpi ne, %1, %c0_i32_0 : i32
    scf.if %2 {
      %cst_10 = arith.constant 0.000000e+00 : f32
      %12 = vector.broadcast %cst_10 : f32 to vector<16x96xf32>
      %c0_11 = arith.constant 0 : index
      %c0_12 = arith.constant 0 : index
      %13 = vector.load %arg7[%c0_11, %c0_12] : memref<16x96xf32, #tpu.memory_space<vmem>>, vector<16x96xf32>
      tpu.vector_store %arg7[%c0_11, %c0_12], %12 {strides = array<i32>} : memref<16x96xf32, #tpu.memory_space<vmem>>, vector<16x96xf32>,
    } else {
    }
    %c0 = arith.constant 0 : index
    %c0_1 = arith.constant 0 : index
    %3 = vector.load %arg7[%c0, %c0_1] : memref<16x96xf32, #tpu.memory_space<vmem>>, vector<16x96xf32>
    %c0_2 = arith.constant 0 : index
    %c0_3 = arith.constant 0 : index
    %4 = vector.load %arg3[%c0_2, %c0_3] : memref<16x32xf32, #tpu.memory_space<vmem>>, vector<16x32xf32>
    %c0_4 = arith.constant 0 : index
    %c0_5 = arith.constant 0 : index
    %5 = vector.load %arg4[%c0_4, %c0_5] : memref<32x96xf32, #tpu.memory_space<vmem>>, vector<32x96xf32>
    %cst = arith.constant dense<0.000000e+00> : vector<16x96xf32>
    %6 = tpu.matmul %4, %5, %cst {dimension_numbers = #tpu.dot_dimension_numbers<[1], [0], [0], [1], [0, 0, 1, 1], [], []>} : vector<16x32xf32>, vector<32x96xf32>, vector<16x96xf32> -> vector<16x96xf32>
    %7 = arith.addf %3, %6 : vector<16x96xf32>
    %c0_6 = arith.constant 0 : index
    %c0_7 = arith.constant 0 : index
    %8 = vector.load %arg7[%c0_6, %c0_7] : memref<16x96xf32, #tpu.memory_space<vmem>>, vector<16x96xf32>
    tpu.vector_store %arg7[%c0_6, %c0_7], %7 {strides = array<i32>} : memref<16x96xf32, #tpu.memory_space<vmem>>, vector<16x96xf32>,
    %c0_i32_8 = arith.constant 0 : i32
    %9 = arith.cmpi eq, %arg2, %c0_i32_8 : i32
    %10 = arith.extui %9 : i1 to i32
    %c0_i32_9 = arith.constant 0 : i32
    %11 = arith.cmpi ne, %10, %c0_i32_9 : i32
    scf.if %11 {
      %c0_10 = arith.constant 0 : index
      %c0_11 = arith.constant 0 : index
      %12 = vector.load %arg7[%c0_10, %c0_11] : memref<16x96xf32, #tpu.memory_space<vmem>>, vector<16x96xf32>
      %c0_12 = arith.constant 0 : index
      %c0_13 = arith.constant 0 : index
      %13 = vector.load %arg5[%c0_12, %c0_13] : memref<1x96xf32, #tpu.memory_space<vmem>>, vector<1x96xf32>
      %14 = vector.broadcast %13 : vector<1x96xf32> to vector<16x96xf32>
      %15 = arith.addf %12, %14 : vector<16x96xf32>
      %c0_14 = arith.constant 0 : index
      %c0_15 = arith.constant 0 : index
      %16 = vector.load %arg6[%c0_14, %c0_15] : memref<16x96xf32, #tpu.memory_space<vmem>>, vector<16x96xf32>
      tpu.vector_store %arg6[%c0_14, %c0_15], %15 {strides = array<i32>} : memref<16x96xf32, #tpu.memory_space<vmem>>, vector<16x96xf32>,
    } else {
    }
    return
  }
  func.func @transform_0(%arg0: i32, %arg1: i32, %arg2: i32) -> (i32, i32) {
    %c0_i32 = arith.constant 0 : i32
    return %arg0, %arg2 : i32, i32
  }
  func.func @transform_1(%arg0: i32, %arg1: i32, %arg2: i32) -> (i32, i32) {
    %c0_i32 = arith.constant 0 : i32
    return %arg2, %arg1 : i32, i32
  }
  func.func @transform_2(%arg0: i32, %arg1: i32, %arg2: i32) -> (i32, i32) {
    %c0_i32 = arith.constant 0 : i32
    %c0_i32_0 = arith.constant 0 : i32
    return %c0_i32, %arg1 : i32, i32
  }
  func.func @transform_3(%arg0: i32, %arg1: i32, %arg2: i32) -> (i32, i32) {
    %c0_i32 = arith.constant 0 : i32
    return %arg0, %arg1 : i32, i32
  }
}

</mosaic_0001>

<llo_original>
// kernel: tpu_custom_call.1
$region0: #{tpu_custom_call.1}
  #allocation0 [shape = 'u32[]', space=smem, size = 0x4, offset = 0x4, fixed_abs, tag = 'smem constant byte address 0x4 - core index']
  #allocation1 [shape = 'u32[144,128]{1,0:T(1,128)}', space=vmem, size = 0x12000, scoped, tag = 'internal scratch']
  #allocation2 [shape = 'f32[16,96]{1,0:T(8,128)}', space=vmem, size = 0x2000, scoped, tag = 'scratch operand']
  %s0 = inlined_call_operand.hbm [shape: f32[16,32], index: 0, kind: input, shape index: {}]
  %s1 = inlined_call_operand.hbm [shape: f32[32,96], index: 1, kind: input, shape index: {}]
  %s2 = inlined_call_operand.vmem [shape: f32[1,96], index: 2, kind: input, shape index: {}]
  %s3 = inlined_call_operand.hbm [shape: f32[16,96], index: 3, kind: output, shape index: {}]
  %s4 = sld [smem:[#allocation0]]
  $region38: #{tpu_custom_call.1} parent=0
    _
  %s6 = ssub.s32 1, %s4
  %s7 = scalar_select 0, %s6, %s4
  $region1: #{tpu_custom_call.1} parent=0
    #allocation3 [shape = 'u8[8192]{0}', space=vmem, size = 0x2000, scoped, tag = 'input window, operand 0, single buffered']
    #allocation4 [shape = 's32[1]{0}', space=sflag, size = 0x4, scoped, tag = 'scoped memory for tpu_custom_call.1']
    #allocation5 [shape = 's32[1]{0}', space=sflag, size = 0x4, scoped, tag = 'scoped memory for tpu_custom_call.1']
    #allocation6 [shape = 'u8[16384]{0}', space=vmem, size = 0x4000, scoped, tag = 'input window, operand 1, single buffered']
    #allocation7 [shape = 's32[1]{0}', space=sflag, size = 0x4, scoped, tag = 'scoped memory for tpu_custom_call.1']
    #allocation8 [shape = 'u8[8192]{0}', space=vmem, size = 0x2000, scoped, tag = 'output window, operand 0, single buffered']
    %8 = vsyncpa [#allocation4], 0
    %9 = vsyncpa [#allocation7], 0
    %10 = vsyncpa [#allocation5], 0
    // Predicated region
    $region2: #{tpu_custom_call.1} parent=1 // pred_check
      _
    $region3: #{tpu_custom_call.1} parent=1 // pred_check_branch
      %12 = sbr.rel (0) target = $region5
    $region4: #{tpu_custom_call.1} parent=1 // pred_region
      %s14 = ssub.s32 256, 256
      %15 = vsyncadd [#allocation4], %s14
      %s16 = sshll.u32 [#allocation3], 4
      %s17 = int_to_ptr.vmem [resolvable:$true] %s16
      %22 = dma.hbm_to_vmem [thread:$0]  %s0, 256, %s17, [#allocation4], 128, 128, 8
    $region5: #{tpu_custom_call.1} parent=1 // pred_fallthru
      _
    // Predicated region
    $region6: #{tpu_custom_call.1} parent=1 // pred_check
      _
    $region7: #{tpu_custom_call.1} parent=1 // pred_check_branch
      %24 = sbr.rel (0) target = $region9
    $region8: #{tpu_custom_call.1} parent=1 // pred_region
      %s26 = ssub.s32 512, 512
      %27 = vsyncadd [#allocation7], %s26
      %s28 = sshll.u32 [#allocation6], 4
      %s29 = int_to_ptr.vmem [resolvable:$true] %s28
      %34 = dma.hbm_to_vmem [thread:$0]  %s1, 512, %s29, [#allocation7], 128, 128, 8
    $region9: #{tpu_custom_call.1} parent=1 // pred_fallthru
      _
    // Predicated region
    $region10: #{tpu_custom_call.1} parent=1 // pred_check
      _
    $region11: #{tpu_custom_call.1} parent=1 // pred_check_branch
      %36 = sbr.rel (0) target = $region13
    $region12: #{tpu_custom_call.1} parent=1 // pred_region
      _
    $region13: #{tpu_custom_call.1} parent=1 // pred_fallthru
      _
    // Predicated region
    $region14: #{tpu_custom_call.1} parent=1 // pred_check
      _
    $region15: #{tpu_custom_call.1} parent=1 // pred_check_branch
      %38 = sbr.rel (0) target = $region17
    $region16: #{tpu_custom_call.1} parent=1 // pred_region
      %39 = dma.done [#allocation4], 256
    $region17: #{tpu_custom_call.1} parent=1 // pred_fallthru
      _
    // Predicated region
    $region18: #{tpu_custom_call.1} parent=1 // pred_check
      _
    $region19: #{tpu_custom_call.1} parent=1 // pred_check_branch
      %41 = sbr.rel (0) target = $region21
    $region20: #{tpu_custom_call.1} parent=1 // pred_region
      %42 = dma.done [#allocation7], 512
    $region21: #{tpu_custom_call.1} parent=1 // pred_fallthru
      _
    %p43 = scmp.eq.s32.totalorder 0, 0
    // Predicated region
    $region22: #{tpu_custom_call.1} parent=1 // pred_check
      %p44 = pneg %p43
    $region23: #{tpu_custom_call.1} parent=1 // pred_check_branch
      %46 = sbr.rel (%p44) target = $region25
    $region24: #{tpu_custom_call.1} parent=1 // pred_region
      %vm47 = vcmask 785408
      %48 = vst.msk [vmem:[#allocation2] sm:$0xff] %vm47, 0.0
      %49 = vst.msk [vmem:[#allocation2 + $0x8] sm:$0xff] %vm47, 0.0
    $region25: #{tpu_custom_call.1} parent=1 // pred_fallthru
      _
    %v50 = vld [vmem:[#allocation2] sm:$0xff]
    %v51 = vld [vmem:[#allocation2 + $0x8] sm:$0xff]
    %v52 = vld [vmem:[#allocation3] sm:$0xff]
    %v53 = vld [vmem:[#allocation3 + $0x8] sm:$0xff]
    %v54 = vld [vmem:[#allocation6] sm:$0xff]
    %v55 = vld [vmem:[#allocation6 + $0x8] sm:$0xff]
    %v56 = vld [vmem:[#allocation6 + $0x10] sm:$0xff]
    %v57 = vld [vmem:[#allocation6 + $0x18] sm:$0xff]
    %vm58 = vcmask 261120
    %v60 = vsel %vm58, %v52, 0
    %v63 = vsel %vm58, %v53, 0
    %65 = vmatprep.subr.mxu0 0.0
    %66 = vmatpush1.msra.mxu0 %v54
    %67 = vmatprep.subr.mxu0 0.0
    %68 = vmatpush1.msra.mxu0 %v55
    %69 = vmatprep.subr.mxu0 0.0
    %70 = vmatpush1.msra.mxu0 %v56
    %71 = vmatprep.subr.mxu0 0.0
    %72 = vmatpush1.msra.mxu0 %v57
    %73 = vmatprep.subr.mxu0 0.0
    %74 = vmatpush1.msra.mxu0 0.0
    %75 = vmatprep.subr.mxu0 0.0
    %76 = vmatpush1.msra.mxu0 0.0
    %77 = vmatprep.subr.mxu0 0.0
    %78 = vmatpush1.msra.mxu0 0.0
    %79 = vmatprep.subr.mxu0 0.0
    %80 = vmatpush1.msra.mxu0 0.0
    %81 = vmatprep.subr.mxu0 0.0
    %82 = vmatpush1.msra.mxu0 0.0
    %83 = vmatprep.subr.mxu0 0.0
    %84 = vmatpush1.msra.mxu0 0.0
    %85 = vmatprep.subr.mxu0 0.0
    %86 = vmatpush1.msra.mxu0 0.0
    %87 = vmatprep.subr.mxu0 0.0
    %88 = vmatpush1.msra.mxu0 0.0
    %89 = vmatprep.subr.mxu0 0.0
    %90 = vmatpush1.msra.mxu0 0.0
    %91 = vmatprep.subr.mxu0 0.0
    %92 = vmatpush1.msra.mxu0 0.0
    %93 = vmatprep.subr.mxu0 0.0
    %94 = vmatpush1.msra.mxu0 0.0
    %95 = vmatprep.subr.mxu0 0.0
    %96 = vmatpush1.msra.mxu0 0.0
    %97 = vmatprep.subr.mxu0 0.0
    %98 = vmatpush1.msra.mxu0 0.0
    %99 = vmatprep.subr.mxu0 0.0
    %100 = vmatpush1.msra.mxu0 0.0
    %101 = vmatprep.subr.mxu0 0.0
    %102 = vmatpush1.msra.mxu0 0.0
    %103 = vmatprep.subr.mxu0 0.0
    %104 = vmatpush1.msra.mxu0 0.0
    %105 = vmatprep.subr.mxu0 0.0
    %106 = vmatpush1.msra.mxu0 0.0
    %107 = vmatprep.subr.mxu0 0.0
    %108 = vmatpush1.msra.mxu0 0.0
    %109 = vmatprep.subr.mxu0 0.0
    %110 = vmatpush1.msra.mxu0 0.0
    %111 = vmatprep.subr.mxu0 0.0
    %112 = vmatpush1.msra.mxu0 0.0
    %113 = vmatprep.subr.mxu0 0.0
    %114 = vmatpush1.msra.mxu0 0.0
    %115 = vmatprep.subr.mxu0 0.0
    %116 = vmatpush1.msra.mxu0 0.0
    %117 = vmatprep.subr.mxu0 0.0
    %118 = vmatpush1.msra.mxu0 0.0
    %119 = vmatprep.subr.mxu0 0.0
    %120 = vmatpush1.msra.mxu0 0.0
    %121 = vmatprep.subr.mxu0 0.0
    %122 = vmatpush1.msra.mxu0 0.0
    %123 = vmatprep.subr.mxu0 0.0
    %124 = vmatpush1.msra.mxu0 0.0
    %125 = vmatprep.subr.mxu0 0.0
    %126 = vmatpush1.msra.mxu0 0.0
    %127 = vmatprep.subr.mxu0 0.0
    %128 = vmatpush1.msra.mxu0 0.0
    %129 = vmatprep.mubr.f32.mxu0 0.0
    %130 = vmatmul.mubr.f32.gmra.mrb[0].mxu0 %v60
    %v131 = vpop.f32.mrb[0].mxu0
    %v132 = vadd.f32 0.0, %v131
    %v133 = vpop.f32.mrb[0].mxu0
    %134 = vmatprep.mubr.f32.mxu0 0.0
    %135 = vmatmul.mubr.f32.gmra.mrb[0].mxu0 %v63
    %v136 = vpop.f32.mrb[0].mxu0
    %v137 = vadd.f32 0.0, %v136
    %v138 = vpop.f32.mrb[0].mxu0
    %139 = vdwg.mxu0
    %v140 = vadd.f32 %v50, %v132
    %v141 = vadd.f32 %v51, %v137
    %vm142 = vcmask 785408
    %143 = vst.msk [vmem:[#allocation2] sm:$0xff] %vm142, %v140
    %144 = vst.msk [vmem:[#allocation2 + $0x8] sm:$0xff] %vm142, %v141
    // Predicated region
    $region26: #{tpu_custom_call.1} parent=1 // pred_check
      %p145 = pneg %p43
    $region27: #{tpu_custom_call.1} parent=1 // pred_check_branch
      %147 = sbr.rel (%p145) target = $region29
    $region28: #{tpu_custom_call.1} parent=1 // pred_region
      %v148 = vld [vmem:[#allocation2] sm:$0xff]
      %v149 = vld [vmem:[#allocation2 + $0x8] sm:$0xff]
      %v150 = vld [vmem:[%s2] sm:$0x1]
      %v152 = vlaneseq
      %v153 = vshrl.u32 %v152, 7
      %v154 = vsub.s32 0, %v153
      %v155 = vrot.slane %v150, %v154
      %v157 = vadd.f32 %v148, %v155
      %v158 = vadd.f32 %v149, %v155
      %159 = vst.msk [vmem:[#allocation8] sm:$0xff] %vm142, %v157
      %160 = vst.msk [vmem:[#allocation8 + $0x8] sm:$0xff] %vm142, %v158
    $region29: #{tpu_custom_call.1} parent=1 // pred_fallthru
      _
    // Predicated region
    $region30: #{tpu_custom_call.1} parent=1 // pred_check
      _
    $region31: #{tpu_custom_call.1} parent=1 // pred_check_branch
      %162 = sbr.rel (0) target = $region33
    $region32: #{tpu_custom_call.1} parent=1 // pred_region
      %s164 = ssub.s32 256, 256
      %165 = vsyncadd [#allocation5], %s164
      %s166 = sshll.u32 [#allocation8], 4
      %s167 = int_to_ptr.vmem [resolvable:$true] %s166
      %172 = dma.vmem_to_hbm [thread:$0]  %s167, 256, %s3, [#allocation5], 128, 128, 8
    $region33: #{tpu_custom_call.1} parent=1 // pred_fallthru
      _
    // Predicated region
    $region34: #{tpu_custom_call.1} parent=1 // pred_check
      _
    $region35: #{tpu_custom_call.1} parent=1 // pred_check_branch
      %174 = sbr.rel (0) target = $region37
    $region36: #{tpu_custom_call.1} parent=1 // pred_region
      %175 = dma.done [#allocation5], 256
    $region37: #{tpu_custom_call.1} parent=1 // pred_fallthru
      _
    %176 = vsyncpa [#allocation4], 1
    %177 = vsyncpa [#allocation7], 1
    %178 = vsyncpa [#allocation5], 1

</llo_original>
